<compile_context>
chip_gen: v6e
topology: v6e:2x2x1
jax: 0.10.0
libtpu: 0.0.40
codegen_flags: <defaults>
</compile_context>

<pallas_src>
import functools

import jax
import jax.numpy as jnp
from jax import lax
from jax.experimental import pallas as pl
from jax.experimental.pallas import tpu as pltpu


# ------------------------------ fused kernel --------------------------------
def _discriminator_kernel(
    dims,                                # static: (B, L1, L2, L3, C1, C2, C3, num_dim)
    # inputs
    x_ref,                               # (B, L0+2, C0) zero-padded, channels-last
    w1_ref, s1_ref,                      # (4*C0, C1), (2, C1)  rows: [gamma; beta]
    w2_ref, s2_ref,                      # (4*C1, C2), (2, C2)
    w3_ref, s3_ref,                      # (4*C2, C3), (2, C3)
    wh_ref,                              # (L3, C3, 1+num_dim)  cols: [src | cls]
    # outputs
    out_ref,                             # (B, 1+num_dim)
    # scratch: padded channels-last intermediate activations (VMEM resident)
    pad1_ref, pad2_ref,                  # (B, L1+2, C1), (B, L2+2, C2)
):
    B, L1, L2, L3, C1, C2, C3, num_dim = dims

    def conv_in_lrelu(inp_ref, w_ref, s_ref, l_out, c_out):
        # Implicit GEMM for the stride-2, K=4 conv:
        #   y[b, l] = sum_k x_pad[b, 2l+k] @ W_k
        # Build the im2col operand by lane-concatenating 4 sublane-strided
        # taps, then one MXU dot with K = 4*C_in and M = B*l_out.
        taps = [inp_ref[:, pl.ds(k, l_out, stride=2), :] for k in range(4)]
        im = jnp.concatenate(taps, axis=-1)                  # (B, l_out, 4*C_in)
        y = jnp.dot(im.reshape(B * l_out, im.shape[-1]), w_ref[...],
                    preferred_element_type=jnp.float32)      # (B*l_out, c_out)
        y = y.reshape(B, l_out, c_out)
        # InstanceNorm1d: per-(sample, channel) stats over length, eps=1e-5,
        # biased variance (PyTorch semantics), affine.  The conv bias cancels
        # under the mean subtraction and is therefore never added.
        mean = jnp.mean(y, axis=1, keepdims=True)
        var = jnp.mean((y - mean) ** 2, axis=1, keepdims=True)
        y = (y - mean) * lax.rsqrt(var + 1e-5)
        y = y * s_ref[0:1, :] + s_ref[1:2, :]
        return jnp.where(y >= 0, y, 0.01 * y)                # leaky_relu(0.01)

    def stash_padded(pad_ref, a, l, c):
        # Zero only the two conv-padding planes (cheap, and safe regardless of
        # how the parallel grid axis is split across TensorCores), then store
        # the activation rows.
        zero_plane = jnp.zeros((B, 1, c), jnp.float32)
        pad_ref[:, 0:1, :] = zero_plane
        pad_ref[:, l + 1:l + 2, :] = zero_plane
        pad_ref[:, 1:l + 1, :] = a

    a1 = conv_in_lrelu(x_ref, w1_ref, s1_ref, L1, C1)        # (B, L1, C1)
    stash_padded(pad1_ref, a1, L1, C1)
    a2 = conv_in_lrelu(pad1_ref, w2_ref, s2_ref, L2, C2)     # (B, L2, C2)
    stash_padded(pad2_ref, a2, L2, C2)
    a3 = conv_in_lrelu(pad2_ref, w3_ref, s3_ref, L3, C3)     # (B, L3, C3)

    # Heads: kernel_size == L3 -> output length 1.  Both heads share one
    # accumulation; each dot has M = B rows.
    h = jnp.dot(a3[:, 0, :], wh_ref[0], preferred_element_type=jnp.float32)
    for l in range(1, L3):
        h = h + jnp.dot(a3[:, l, :], wh_ref[l],
                        preferred_element_type=jnp.float32)  # (B, 1+num_dim)

    # sigmoid for the src column (overflow-safe tanh form), single merged store.
    src = 0.5 * (jnp.tanh(0.5 * h[:, 0:1]) + 1.0)
    out_ref[...] = jnp.concatenate([src, h[:, 1:]], axis=-1)


# ------------------------------ wrapper --------------------------------------
@jax.jit
def discriminator_forward(x, p):
    """x: (N, 3, L) float32 in PyTorch NCL layout -> (src (N,1), cls (N,num_dim))."""
    N, C0, L0 = x.shape
    assert L0 % 8 == 0, "seq_length must be divisible by 2**num_layer = 8"
    L1, L2, L3 = L0 // 2, L0 // 4, L0 // 8
    C1, C2, C3 = p["w1"].shape[0], p["w2"].shape[0], p["w3"].shape[0]
    num_dim = p["w_cls"].shape[0]
    assert p["w_src"].shape[2] == L3 and p["w_cls"].shape[2] == L3

    # Batch tile B: amortize per-step overhead & fill MXU M (B*L1 ~= 128), but
    # keep >=2 grid steps whenever N >= 2 so v7x's two TensorCores both work.
    target = max(1, 128 // L1)
    max_tile = max(1, -(-N // 2))
    B = max(1, min(target, max_tile, N))
    n_steps = -(-N // B)
    n_pad = n_steps * B

    # Channels-last once; fold conv1's zero-padding and the batch padding in.
    x_cl = jnp.transpose(x, (0, 2, 1))                           # (N, L0, C0)
    x_cl = jnp.pad(x_cl, ((0, n_pad - N), (1, 1), (0, 0)))
    x_blk = x_cl.reshape(n_steps, B, L0 + 2, C0)

    def conv_w(w):                 # (C_out, C_in, 4) -> (4*C_in, C_out)
        co, ci, k = w.shape
        return jnp.transpose(w, (2, 1, 0)).reshape(k * ci, co)

    def scale(g, be):              # pack affine params: rows [gamma; beta]
        return jnp.stack([g, be], axis=0)

    # Merge the two head convs: column 0 = src, columns 1.. = cls.
    w_heads = jnp.transpose(
        jnp.concatenate([p["w_src"], p["w_cls"]], axis=0), (2, 1, 0))  # (L3,C3,1+nd)

    def rep(shape):                # weights: same (only) block every step
        return pl.BlockSpec(shape, lambda n: (0,) * len(shape))

    kernel = functools.partial(
        _discriminator_kernel, (B, L1, L2, L3, C1, C2, C3, num_dim))

    out = pl.pallas_call(
        kernel,
        out_shape=jax.ShapeDtypeStruct((n_steps, B, 1 + num_dim), jnp.float32),
        grid_spec=pltpu.PrefetchScalarGridSpec(
            num_scalar_prefetch=0,
            grid=(n_steps,),
            in_specs=[
                pl.BlockSpec((None, B, L0 + 2, C0), lambda n: (n, 0, 0, 0)),
                rep((4 * C0, C1)), rep((2, C1)),
                rep((4 * C1, C2)), rep((2, C2)),
                rep((4 * C2, C3)), rep((2, C3)),
                rep((L3, C3, 1 + num_dim)),
            ],
            out_specs=pl.BlockSpec((None, B, 1 + num_dim), lambda n: (n, 0, 0)),
            scratch_shapes=[
                pltpu.VMEM((B, L1 + 2, C1), jnp.float32),
                pltpu.VMEM((B, L2 + 2, C2), jnp.float32),
            ],
        ),
        compiler_params=pltpu.CompilerParams(
            dimension_semantics=("parallel",)),
    )(
        x_blk,
        conv_w(p["w1"]), scale(p["g1"], p["be1"]),
        conv_w(p["w2"]), scale(p["g2"], p["be2"]),
        conv_w(p["w3"]), scale(p["g3"], p["be3"]),
        w_heads,
    )
    out = out.reshape(n_pad, 1 + num_dim)[:N]
    return out[:, 0:1], out[:, 1:]


# --------------------------- deterministic params ---------------------------
def init_params(key, num_dim, seq_length, conv_dim):
    final_kernel_size = seq_length // 8
    ks = jax.random.split(key, 14)

    def w_init(k, shape):
        fan_in = shape[1] * shape[2]
        return jax.random.normal(k, shape, jnp.float32) / jnp.sqrt(fan_in)

    c1, c2, c3 = conv_dim, conv_dim * 2, conv_dim * 4
    return {
        # conv biases are non-zero to exercise the InstanceNorm cancellation
        "w1": w_init(ks[0], (c1, 3, 4)),
        "b1": 0.1 * jax.random.normal(ks[1], (c1,), jnp.float32),
        "g1": 1.0 + 0.1 * jax.random.normal(ks[2], (c1,), jnp.float32),
        "be1": 0.1 * jax.random.normal(ks[3], (c1,), jnp.float32),
        "w2": w_init(ks[4], (c2, c1, 4)),
        "b2": 0.1 * jax.random.normal(ks[5], (c2,), jnp.float32),
        "g2": 1.0 + 0.1 * jax.random.normal(ks[6], (c2,), jnp.float32),
        "be2": 0.1 * jax.random.normal(ks[7], (c2,), jnp.float32),
        "w3": w_init(ks[8], (c3, c2, 4)),
        "b3": 0.1 * jax.random.normal(ks[9], (c3,), jnp.float32),
        "g3": 1.0 + 0.1 * jax.random.normal(ks[10], (c3,), jnp.float32),
        "be3": 0.1 * jax.random.normal(ks[11], (c3,), jnp.float32),
        "w_src": w_init(ks[12], (1, c3, final_kernel_size)),
        "w_cls": w_init(ks[13], (num_dim, c3, final_kernel_size)),
    }


# ---------------------------- pure-JAX reference ----------------------------
def ref_forward(x, p):
    def conv(x, w, b, stride, pad):
        y = lax.conv_general_dilated(x, w, (stride,), [(pad, pad)],
                                     dimension_numbers=("NCH", "OIH", "NCH"))
        if b is not None:
            y = y + b[None, :, None]
        return y

    def inorm(y, g, be):
        m = jnp.mean(y, axis=2, keepdims=True)
        v = jnp.mean((y - m) ** 2, axis=2, keepdims=True)
        return (y - m) / jnp.sqrt(v + 1e-5) * g[None, :, None] + be[None, :, None]

    def lrelu(y):
        return jnp.where(y >= 0, y, 0.01 * y)

    y = lrelu(inorm(conv(x, p["w1"], p["b1"], 2, 1), p["g1"], p["be1"]))
    y = lrelu(inorm(conv(y, p["w2"], p["b2"], 2, 1), p["g2"], p["be2"]))
    y = lrelu(inorm(conv(y, p["w3"], p["b3"], 2, 1), p["g3"], p["be3"]))
    src = jax.nn.sigmoid(conv(y, p["w_src"], None, 1, 0)).reshape(y.shape[0], 1)
    cls = conv(y, p["w_cls"], None, 1, 0).reshape(y.shape[0], -1)
    return src, cls


if __name__ == "__main__":
    num_dim, seq_length, conv_dim, batch = 4, 16, 8, 2
    key = jax.random.PRNGKey(0)
    k_x, k_p = jax.random.split(key)
    x = jax.random.normal(k_x, (batch, 3, seq_length), jnp.float32)
    params = init_params(k_p, num_dim, seq_length, conv_dim)

    src, cls = discriminator_forward(x, params)
    src = jax.block_until_ready(src)
    cls = jax.block_until_ready(cls)

    src_ref, cls_ref = ref_forward(x, params)
    assert src.shape == (batch, 1) and cls.shape == (batch, num_dim)
    assert jnp.allclose(src, src_ref, atol=5e-5, rtol=5e-4)
    assert jnp.allclose(cls, cls_ref, atol=5e-5, rtol=5e-4)

    print("KERNEL_OK")
</pallas_src>

<mosaic_0001>
module attributes {stable_mosaic.version = 11 : i64} {
  func.func @_discriminator_kernel(%arg0: i32, %arg1: memref<1x1x18x3xf32, #tpu.memory_space<vmem>>, %arg2: memref<12x8xf32, #tpu.memory_space<vmem>>, %arg3: memref<2x8xf32, #tpu.memory_space<vmem>>, %arg4: memref<32x16xf32, #tpu.memory_space<vmem>>, %arg5: memref<2x16xf32, #tpu.memory_space<vmem>>, %arg6: memref<64x32xf32, #tpu.memory_space<vmem>>, %arg7: memref<2x32xf32, #tpu.memory_space<vmem>>, %arg8: memref<2x32x5xf32, #tpu.memory_space<vmem>>, %arg9: memref<1x1x5xf32, #tpu.memory_space<vmem>>, %arg10: memref<1x10x8xf32, #tpu.memory_space<vmem>>, %arg11: memref<1x6x16xf32, #tpu.memory_space<vmem>>) attributes {dimension_semantics = [#tpu.dimension_semantics<parallel>], iteration_bounds = array<i64: 2>, scalar_prefetch = 0 : i64, scratch_operands = 2 : i64, tpu.core_type = #tpu.core_type<tc>, window_params = [{transform_indices = @transform_0, window_bounds = array<i64: 1, 1, 18, 3>}, {pipeline_mode = #tpu.pipeline_mode<synchronous>, transform_indices = @transform_1, window_bounds = array<i64: 12, 8>}, {pipeline_mode = #tpu.pipeline_mode<synchronous>, transform_indices = @transform_2, window_bounds = array<i64: 2, 8>}, {pipeline_mode = #tpu.pipeline_mode<synchronous>, transform_indices = @transform_3, window_bounds = array<i64: 32, 16>}, {pipeline_mode = #tpu.pipeline_mode<synchronous>, transform_indices = @transform_4, window_bounds = array<i64: 2, 16>}, {pipeline_mode = #tpu.pipeline_mode<synchronous>, transform_indices = @transform_5, window_bounds = array<i64: 64, 32>}, {pipeline_mode = #tpu.pipeline_mode<synchronous>, transform_indices = @transform_6, window_bounds = array<i64: 2, 32>}, {pipeline_mode = #tpu.pipeline_mode<synchronous>, transform_indices = @transform_7, window_bounds = array<i64: 2, 32, 5>}, {transform_indices = @transform_8, window_bounds = array<i64: 1, 1, 5>}]} {
    %c0 = arith.constant 0 : index
    %c0_0 = arith.constant 0 : index
    %c0_1 = arith.constant 0 : index
    %c0_2 = arith.constant 0 : index
    %0 = tpu.strided_load %arg1[%c0, %c0_0, %c0_1, %c0_2] {strides = array<i32: 1, 1, 2, 1>} : memref<1x1x18x3xf32, #tpu.memory_space<vmem>>, vector<1x1x8x3xf32>
    %1 = vector.shape_cast %0 : vector<1x1x8x3xf32> to vector<1x8x3xf32>
    %c0_3 = arith.constant 0 : index
    %c0_4 = arith.constant 0 : index
    %c1 = arith.constant 1 : index
    %c0_5 = arith.constant 0 : index
    %2 = tpu.strided_load %arg1[%c0_3, %c0_4, %c1, %c0_5] {strides = array<i32: 1, 1, 2, 1>} : memref<1x1x18x3xf32, #tpu.memory_space<vmem>>, vector<1x1x8x3xf32>
    %3 = vector.shape_cast %2 : vector<1x1x8x3xf32> to vector<1x8x3xf32>
    %c0_6 = arith.constant 0 : index
    %c0_7 = arith.constant 0 : index
    %c2 = arith.constant 2 : index
    %c0_8 = arith.constant 0 : index
    %4 = tpu.strided_load %arg1[%c0_6, %c0_7, %c2, %c0_8] {strides = array<i32: 1, 1, 2, 1>} : memref<1x1x18x3xf32, #tpu.memory_space<vmem>>, vector<1x1x8x3xf32>
    %5 = vector.shape_cast %4 : vector<1x1x8x3xf32> to vector<1x8x3xf32>
    %c0_9 = arith.constant 0 : index
    %c0_10 = arith.constant 0 : index
    %c3 = arith.constant 3 : index
    %c0_11 = arith.constant 0 : index
    %6 = tpu.strided_load %arg1[%c0_9, %c0_10, %c3, %c0_11] {strides = array<i32: 1, 1, 2, 1>} : memref<1x1x18x3xf32, #tpu.memory_space<vmem>>, vector<1x1x8x3xf32>
    %7 = vector.shape_cast %6 : vector<1x1x8x3xf32> to vector<1x8x3xf32>
    %8 = tpu.concatenate %1, %3, %5, %7 in 2 : vector<1x8x3xf32>, vector<1x8x3xf32>, vector<1x8x3xf32>, vector<1x8x3xf32> -> vector<1x8x12xf32>
    %9 = vector.shape_cast %8 : vector<1x8x12xf32> to vector<8x12xf32>
    %c0_12 = arith.constant 0 : index
    %c0_13 = arith.constant 0 : index
    %10 = vector.load %arg2[%c0_12, %c0_13] : memref<12x8xf32, #tpu.memory_space<vmem>>, vector<12x8xf32>
    %cst = arith.constant dense<0.000000e+00> : vector<8x8xf32>
    %11 = tpu.matmul %9, %10, %cst {dimension_numbers = #tpu.dot_dimension_numbers<[1], [0], [0], [1], [0, 0, 1, 1], [], []>} : vector<8x12xf32>, vector<12x8xf32>, vector<8x8xf32> -> vector<8x8xf32>
    %12 = vector.shape_cast %11 : vector<8x8xf32> to vector<1x8x8xf32>
    %cst_14 = arith.constant dense<0.000000e+00> : vector<1x8xf32>
    %13 = vector.multi_reduction <add>, %12, %cst_14 [1] : vector<1x8x8xf32> to vector<1x8xf32>
    %14 = vector.shape_cast %13 : vector<1x8xf32> to vector<1x1x8xf32>
    %cst_15 = arith.constant 8.000000e+00 : f32
    %15 = vector.broadcast %cst_15 : f32 to vector<1x1x8xf32>
    %16 = arith.divf %14, %15 : vector<1x1x8xf32>
    %17 = vector.broadcast %16 : vector<1x1x8xf32> to vector<1x8x8xf32>
    %18 = arith.subf %12, %17 : vector<1x8x8xf32>
    %19 = arith.mulf %18, %18 : vector<1x8x8xf32>
    %cst_16 = arith.constant dense<0.000000e+00> : vector<1x8xf32>
    %20 = vector.multi_reduction <add>, %19, %cst_16 [1] : vector<1x8x8xf32> to vector<1x8xf32>
    %21 = vector.shape_cast %20 : vector<1x8xf32> to vector<1x1x8xf32>
    %cst_17 = arith.constant 8.000000e+00 : f32
    %22 = vector.broadcast %cst_17 : f32 to vector<1x1x8xf32>
    %23 = arith.divf %21, %22 : vector<1x1x8xf32>
    %24 = vector.broadcast %16 : vector<1x1x8xf32> to vector<1x8x8xf32>
    %25 = arith.subf %12, %24 : vector<1x8x8xf32>
    %cst_18 = arith.constant 9.99999974E-6 : f32
    %26 = vector.broadcast %cst_18 : f32 to vector<1x1x8xf32>
    %27 = arith.addf %23, %26 : vector<1x1x8xf32>
    %28 = math.rsqrt %27 : vector<1x1x8xf32>
    %29 = vector.broadcast %28 : vector<1x1x8xf32> to vector<1x8x8xf32>
    %30 = arith.mulf %25, %29 : vector<1x8x8xf32>
    %c0_19 = arith.constant 0 : index
    %c0_20 = arith.constant 0 : index
    %31 = vector.load %arg3[%c0_19, %c0_20] : memref<2x8xf32, #tpu.memory_space<vmem>>, vector<1x8xf32>
    %32 = vector.shape_cast %31 : vector<1x8xf32> to vector<1x1x8xf32>
    %33 = vector.broadcast %32 : vector<1x1x8xf32> to vector<1x8x8xf32>
    %34 = arith.mulf %30, %33 : vector<1x8x8xf32>
    %c1_21 = arith.constant 1 : index
    %c0_22 = arith.constant 0 : index
    %35 = vector.load %arg3[%c1_21, %c0_22] : memref<2x8xf32, #tpu.memory_space<vmem>>, vector<1x8xf32>
    %36 = vector.shape_cast %35 : vector<1x8xf32> to vector<1x1x8xf32>
    %37 = vector.broadcast %36 : vector<1x1x8xf32> to vector<1x8x8xf32>
    %38 = arith.addf %34, %37 : vector<1x8x8xf32>
    %cst_23 = arith.constant 0.000000e+00 : f32
    %39 = vector.broadcast %cst_23 : f32 to vector<1x8x8xf32>
    %40 = arith.cmpf oge, %38, %39 : vector<1x8x8xf32>
    %cst_24 = arith.constant 0.00999999977 : f32
    %41 = vector.broadcast %cst_24 : f32 to vector<1x8x8xf32>
    %42 = arith.mulf %41, %38 : vector<1x8x8xf32>
    %43 = arith.select %40, %38, %42 : vector<1x8x8xi1>, vector<1x8x8xf32>
    %cst_25 = arith.constant 0.000000e+00 : f32
    %44 = vector.broadcast %cst_25 : f32 to vector<1x1x8xf32>
    %c0_26 = arith.constant 0 : index
    %c0_27 = arith.constant 0 : index
    %c0_28 = arith.constant 0 : index
    %45 = vector.load %arg10[%c0_26, %c0_27, %c0_28] : memref<1x10x8xf32, #tpu.memory_space<vmem>>, vector<1x1x8xf32>
    tpu.vector_store %arg10[%c0_26, %c0_27, %c0_28], %44 {strides = array<i32>} : memref<1x10x8xf32, #tpu.memory_space<vmem>>, vector<1x1x8xf32>,
    %c0_29 = arith.constant 0 : index
    %c9 = arith.constant 9 : index
    %c0_30 = arith.constant 0 : index
    %46 = vector.load %arg10[%c0_29, %c9, %c0_30] : memref<1x10x8xf32, #tpu.memory_space<vmem>>, vector<1x1x8xf32>
    tpu.vector_store %arg10[%c0_29, %c9, %c0_30], %44 {strides = array<i32>} : memref<1x10x8xf32, #tpu.memory_space<vmem>>, vector<1x1x8xf32>,
    %c0_31 = arith.constant 0 : index
    %c1_32 = arith.constant 1 : index
    %c0_33 = arith.constant 0 : index
    %47 = vector.load %arg10[%c0_31, %c1_32, %c0_33] : memref<1x10x8xf32, #tpu.memory_space<vmem>>, vector<1x8x8xf32>
    tpu.vector_store %arg10[%c0_31, %c1_32, %c0_33], %43 {strides = array<i32>} : memref<1x10x8xf32, #tpu.memory_space<vmem>>, vector<1x8x8xf32>,
    %c0_34 = arith.constant 0 : index
    %c0_35 = arith.constant 0 : index
    %c0_36 = arith.constant 0 : index
    %48 = tpu.strided_load %arg10[%c0_34, %c0_35, %c0_36] {strides = array<i32: 1, 2, 1>} : memref<1x10x8xf32, #tpu.memory_space<vmem>>, vector<1x4x8xf32>
    %c0_37 = arith.constant 0 : index
    %c1_38 = arith.constant 1 : index
    %c0_39 = arith.constant 0 : index
    %49 = tpu.strided_load %arg10[%c0_37, %c1_38, %c0_39] {strides = array<i32: 1, 2, 1>} : memref<1x10x8xf32, #tpu.memory_space<vmem>>, vector<1x4x8xf32>
    %c0_40 = arith.constant 0 : index
    %c2_41 = arith.constant 2 : index
    %c0_42 = arith.constant 0 : index
    %50 = tpu.strided_load %arg10[%c0_40, %c2_41, %c0_42] {strides = array<i32: 1, 2, 1>} : memref<1x10x8xf32, #tpu.memory_space<vmem>>, vector<1x4x8xf32>
    %c0_43 = arith.constant 0 : index
    %c3_44 = arith.constant 3 : index
    %c0_45 = arith.constant 0 : index
    %51 = tpu.strided_load %arg10[%c0_43, %c3_44, %c0_45] {strides = array<i32: 1, 2, 1>} : memref<1x10x8xf32, #tpu.memory_space<vmem>>, vector<1x4x8xf32>
    %52 = tpu.concatenate %48, %49, %50, %51 in 2 : vector<1x4x8xf32>, vector<1x4x8xf32>, vector<1x4x8xf32>, vector<1x4x8xf32> -> vector<1x4x32xf32>
    %53 = vector.shape_cast %52 : vector<1x4x32xf32> to vector<4x32xf32>
    %c0_46 = arith.constant 0 : index
    %c0_47 = arith.constant 0 : index
    %54 = vector.load %arg4[%c0_46, %c0_47] : memref<32x16xf32, #tpu.memory_space<vmem>>, vector<32x16xf32>
    %cst_48 = arith.constant dense<0.000000e+00> : vector<4x16xf32>
    %55 = tpu.matmul %53, %54, %cst_48 {dimension_numbers = #tpu.dot_dimension_numbers<[1], [0], [0], [1], [0, 0, 1, 1], [], []>} : vector<4x32xf32>, vector<32x16xf32>, vector<4x16xf32> -> vector<4x16xf32>
    %56 = vector.shape_cast %55 : vector<4x16xf32> to vector<1x4x16xf32>
    %cst_49 = arith.constant dense<0.000000e+00> : vector<1x16xf32>
    %57 = vector.multi_reduction <add>, %56, %cst_49 [1] : vector<1x4x16xf32> to vector<1x16xf32>
    %58 = vector.shape_cast %57 : vector<1x16xf32> to vector<1x1x16xf32>
    %cst_50 = arith.constant 4.000000e+00 : f32
    %59 = vector.broadcast %cst_50 : f32 to vector<1x1x16xf32>
    %60 = arith.divf %58, %59 : vector<1x1x16xf32>
    %61 = vector.broadcast %60 : vector<1x1x16xf32> to vector<1x4x16xf32>
    %62 = arith.subf %56, %61 : vector<1x4x16xf32>
    %63 = arith.mulf %62, %62 : vector<1x4x16xf32>
    %cst_51 = arith.constant dense<0.000000e+00> : vector<1x16xf32>
    %64 = vector.multi_reduction <add>, %63, %cst_51 [1] : vector<1x4x16xf32> to vector<1x16xf32>
    %65 = vector.shape_cast %64 : vector<1x16xf32> to vector<1x1x16xf32>
    %cst_52 = arith.constant 4.000000e+00 : f32
    %66 = vector.broadcast %cst_52 : f32 to vector<1x1x16xf32>
    %67 = arith.divf %65, %66 : vector<1x1x16xf32>
    %68 = vector.broadcast %60 : vector<1x1x16xf32> to vector<1x4x16xf32>
    %69 = arith.subf %56, %68 : vector<1x4x16xf32>
    %cst_53 = arith.constant 9.99999974E-6 : f32
    %70 = vector.broadcast %cst_53 : f32 to vector<1x1x16xf32>
    %71 = arith.addf %67, %70 : vector<1x1x16xf32>
    %72 = math.rsqrt %71 : vector<1x1x16xf32>
    %73 = vector.broadcast %72 : vector<1x1x16xf32> to vector<1x4x16xf32>
    %74 = arith.mulf %69, %73 : vector<1x4x16xf32>
    %c0_54 = arith.constant 0 : index
    %c0_55 = arith.constant 0 : index
    %75 = vector.load %arg5[%c0_54, %c0_55] : memref<2x16xf32, #tpu.memory_space<vmem>>, vector<1x16xf32>
    %76 = vector.shape_cast %75 : vector<1x16xf32> to vector<1x1x16xf32>
    %77 = vector.broadcast %76 : vector<1x1x16xf32> to vector<1x4x16xf32>
    %78 = arith.mulf %74, %77 : vector<1x4x16xf32>
    %c1_56 = arith.constant 1 : index
    %c0_57 = arith.constant 0 : index
    %79 = vector.load %arg5[%c1_56, %c0_57] : memref<2x16xf32, #tpu.memory_space<vmem>>, vector<1x16xf32>
    %80 = vector.shape_cast %79 : vector<1x16xf32> to vector<1x1x16xf32>
    %81 = vector.broadcast %80 : vector<1x1x16xf32> to vector<1x4x16xf32>
    %82 = arith.addf %78, %81 : vector<1x4x16xf32>
    %cst_58 = arith.constant 0.000000e+00 : f32
    %83 = vector.broadcast %cst_58 : f32 to vector<1x4x16xf32>
    %84 = arith.cmpf oge, %82, %83 : vector<1x4x16xf32>
    %cst_59 = arith.constant 0.00999999977 : f32
    %85 = vector.broadcast %cst_59 : f32 to vector<1x4x16xf32>
    %86 = arith.mulf %85, %82 : vector<1x4x16xf32>
    %87 = arith.select %84, %82, %86 : vector<1x4x16xi1>, vector<1x4x16xf32>
    %cst_60 = arith.constant 0.000000e+00 : f32
    %88 = vector.broadcast %cst_60 : f32 to vector<1x1x16xf32>
    %c0_61 = arith.constant 0 : index
    %c0_62 = arith.constant 0 : index
    %c0_63 = arith.constant 0 : index
    %89 = vector.load %arg11[%c0_61, %c0_62, %c0_63] : memref<1x6x16xf32, #tpu.memory_space<vmem>>, vector<1x1x16xf32>
    tpu.vector_store %arg11[%c0_61, %c0_62, %c0_63], %88 {strides = array<i32>} : memref<1x6x16xf32, #tpu.memory_space<vmem>>, vector<1x1x16xf32>,
    %c0_64 = arith.constant 0 : index
    %c5 = arith.constant 5 : index
    %c0_65 = arith.constant 0 : index
    %90 = vector.load %arg11[%c0_64, %c5, %c0_65] : memref<1x6x16xf32, #tpu.memory_space<vmem>>, vector<1x1x16xf32>
    tpu.vector_store %arg11[%c0_64, %c5, %c0_65], %88 {strides = array<i32>} : memref<1x6x16xf32, #tpu.memory_space<vmem>>, vector<1x1x16xf32>,
    %c0_66 = arith.constant 0 : index
    %c1_67 = arith.constant 1 : index
    %c0_68 = arith.constant 0 : index
    %91 = vector.load %arg11[%c0_66, %c1_67, %c0_68] : memref<1x6x16xf32, #tpu.memory_space<vmem>>, vector<1x4x16xf32>
    tpu.vector_store %arg11[%c0_66, %c1_67, %c0_68], %87 {strides = array<i32>} : memref<1x6x16xf32, #tpu.memory_space<vmem>>, vector<1x4x16xf32>,
    %c0_69 = arith.constant 0 : index
    %c0_70 = arith.constant 0 : index
    %c0_71 = arith.constant 0 : index
    %92 = tpu.strided_load %arg11[%c0_69, %c0_70, %c0_71] {strides = array<i32: 1, 2, 1>} : memref<1x6x16xf32, #tpu.memory_space<vmem>>, vector<1x2x16xf32>
    %c0_72 = arith.constant 0 : index
    %c1_73 = arith.constant 1 : index
    %c0_74 = arith.constant 0 : index
    %93 = tpu.strided_load %arg11[%c0_72, %c1_73, %c0_74] {strides = array<i32: 1, 2, 1>} : memref<1x6x16xf32, #tpu.memory_space<vmem>>, vector<1x2x16xf32>
    %c0_75 = arith.constant 0 : index
    %c2_76 = arith.constant 2 : index
    %c0_77 = arith.constant 0 : index
    %94 = tpu.strided_load %arg11[%c0_75, %c2_76, %c0_77] {strides = array<i32: 1, 2, 1>} : memref<1x6x16xf32, #tpu.memory_space<vmem>>, vector<1x2x16xf32>
    %c0_78 = arith.constant 0 : index
    %c3_79 = arith.constant 3 : index
    %c0_80 = arith.constant 0 : index
    %95 = tpu.strided_load %arg11[%c0_78, %c3_79, %c0_80] {strides = array<i32: 1, 2, 1>} : memref<1x6x16xf32, #tpu.memory_space<vmem>>, vector<1x2x16xf32>
    %96 = tpu.concatenate %92, %93, %94, %95 in 2 : vector<1x2x16xf32>, vector<1x2x16xf32>, vector<1x2x16xf32>, vector<1x2x16xf32> -> vector<1x2x64xf32>
    %97 = vector.shape_cast %96 : vector<1x2x64xf32> to vector<2x64xf32>
    %c0_81 = arith.constant 0 : index
    %c0_82 = arith.constant 0 : index
    %98 = vector.load %arg6[%c0_81, %c0_82] : memref<64x32xf32, #tpu.memory_space<vmem>>, vector<64x32xf32>
    %cst_83 = arith.constant dense<0.000000e+00> : vector<2x32xf32>
    %99 = tpu.matmul %97, %98, %cst_83 {dimension_numbers = #tpu.dot_dimension_numbers<[1], [0], [0], [1], [0, 0, 1, 1], [], []>} : vector<2x64xf32>, vector<64x32xf32>, vector<2x32xf32> -> vector<2x32xf32>
    %100 = vector.shape_cast %99 : vector<2x32xf32> to vector<1x2x32xf32>
    %cst_84 = arith.constant dense<0.000000e+00> : vector<1x32xf32>
    %101 = vector.multi_reduction <add>, %100, %cst_84 [1] : vector<1x2x32xf32> to vector<1x32xf32>
    %102 = vector.shape_cast %101 : vector<1x32xf32> to vector<1x1x32xf32>
    %cst_85 = arith.constant 2.000000e+00 : f32
    %103 = vector.broadcast %cst_85 : f32 to vector<1x1x32xf32>
    %104 = arith.divf %102, %103 : vector<1x1x32xf32>
    %105 = vector.broadcast %104 : vector<1x1x32xf32> to vector<1x2x32xf32>
    %106 = arith.subf %100, %105 : vector<1x2x32xf32>
    %107 = arith.mulf %106, %106 : vector<1x2x32xf32>
    %cst_86 = arith.constant dense<0.000000e+00> : vector<1x32xf32>
    %108 = vector.multi_reduction <add>, %107, %cst_86 [1] : vector<1x2x32xf32> to vector<1x32xf32>
    %109 = vector.shape_cast %108 : vector<1x32xf32> to vector<1x1x32xf32>
    %cst_87 = arith.constant 2.000000e+00 : f32
    %110 = vector.broadcast %cst_87 : f32 to vector<1x1x32xf32>
    %111 = arith.divf %109, %110 : vector<1x1x32xf32>
    %112 = vector.broadcast %104 : vector<1x1x32xf32> to vector<1x2x32xf32>
    %113 = arith.subf %100, %112 : vector<1x2x32xf32>
    %cst_88 = arith.constant 9.99999974E-6 : f32
    %114 = vector.broadcast %cst_88 : f32 to vector<1x1x32xf32>
    %115 = arith.addf %111, %114 : vector<1x1x32xf32>
    %116 = math.rsqrt %115 : vector<1x1x32xf32>
    %117 = vector.broadcast %116 : vector<1x1x32xf32> to vector<1x2x32xf32>
    %118 = arith.mulf %113, %117 : vector<1x2x32xf32>
    %c0_89 = arith.constant 0 : index
    %c0_90 = arith.constant 0 : index
    %119 = vector.load %arg7[%c0_89, %c0_90] : memref<2x32xf32, #tpu.memory_space<vmem>>, vector<1x32xf32>
    %120 = vector.shape_cast %119 : vector<1x32xf32> to vector<1x1x32xf32>
    %121 = vector.broadcast %120 : vector<1x1x32xf32> to vector<1x2x32xf32>
    %122 = arith.mulf %118, %121 : vector<1x2x32xf32>
    %c1_91 = arith.constant 1 : index
    %c0_92 = arith.constant 0 : index
    %123 = vector.load %arg7[%c1_91, %c0_92] : memref<2x32xf32, #tpu.memory_space<vmem>>, vector<1x32xf32>
    %124 = vector.shape_cast %123 : vector<1x32xf32> to vector<1x1x32xf32>
    %125 = vector.broadcast %124 : vector<1x1x32xf32> to vector<1x2x32xf32>
    %126 = arith.addf %122, %125 : vector<1x2x32xf32>
    %cst_93 = arith.constant 0.000000e+00 : f32
    %127 = vector.broadcast %cst_93 : f32 to vector<1x2x32xf32>
    %128 = arith.cmpf oge, %126, %127 : vector<1x2x32xf32>
    %cst_94 = arith.constant 0.00999999977 : f32
    %129 = vector.broadcast %cst_94 : f32 to vector<1x2x32xf32>
    %130 = arith.mulf %129, %126 : vector<1x2x32xf32>
    %131 = arith.select %128, %126, %130 : vector<1x2x32xi1>, vector<1x2x32xf32>
    %132 = vector.extract_strided_slice %131 {offsets = [0, 0, 0], sizes = [1, 1, 32], strides = [1, 1, 1]} : vector<1x2x32xf32> to vector<1x1x32xf32>
    %133 = vector.shape_cast %132 : vector<1x1x32xf32> to vector<1x32xf32>
    %c0_95 = arith.constant 0 : index
    %c0_96 = arith.constant 0 : index
    %c0_97 = arith.constant 0 : index
    %134 = vector.load %arg8[%c0_95, %c0_96, %c0_97] : memref<2x32x5xf32, #tpu.memory_space<vmem>>, vector<1x32x5xf32>
    %135 = vector.shape_cast %134 : vector<1x32x5xf32> to vector<32x5xf32>
    %cst_98 = arith.constant dense<0.000000e+00> : vector<1x5xf32>
    %136 = tpu.matmul %133, %135, %cst_98 {dimension_numbers = #tpu.dot_dimension_numbers<[1], [0], [0], [1], [0, 0, 1, 1], [], []>} : vector<1x32xf32>, vector<32x5xf32>, vector<1x5xf32> -> vector<1x5xf32>
    %137 = vector.extract_strided_slice %131 {offsets = [0, 1, 0], sizes = [1, 1, 32], strides = [1, 1, 1]} : vector<1x2x32xf32> to vector<1x1x32xf32>
    %138 = vector.shape_cast %137 : vector<1x1x32xf32> to vector<1x32xf32>
    %c1_99 = arith.constant 1 : index
    %c0_100 = arith.constant 0 : index
    %c0_101 = arith.constant 0 : index
    %139 = vector.load %arg8[%c1_99, %c0_100, %c0_101] : memref<2x32x5xf32, #tpu.memory_space<vmem>>, vector<1x32x5xf32>
    %140 = vector.shape_cast %139 : vector<1x32x5xf32> to vector<32x5xf32>
    %cst_102 = arith.constant dense<0.000000e+00> : vector<1x5xf32>
    %141 = tpu.matmul %138, %140, %cst_102 {dimension_numbers = #tpu.dot_dimension_numbers<[1], [0], [0], [1], [0, 0, 1, 1], [], []>} : vector<1x32xf32>, vector<32x5xf32>, vector<1x5xf32> -> vector<1x5xf32>
    %142 = arith.addf %136, %141 : vector<1x5xf32>
    %143 = vector.extract_strided_slice %142 {offsets = [0, 0], sizes = [1, 1], strides = [1, 1]} : vector<1x5xf32> to vector<1x1xf32>
    %cst_103 = arith.constant 5.000000e-01 : f32
    %144 = vector.broadcast %cst_103 : f32 to vector<1x1xf32>
    %145 = arith.mulf %144, %143 : vector<1x1xf32>
    %146 = math.tanh %145 : vector<1x1xf32>
    %cst_104 = arith.constant 1.000000e+00 : f32
    %147 = vector.broadcast %cst_104 : f32 to vector<1x1xf32>
    %148 = arith.addf %146, %147 : vector<1x1xf32>
    %cst_105 = arith.constant 5.000000e-01 : f32
    %149 = vector.broadcast %cst_105 : f32 to vector<1x1xf32>
    %150 = arith.mulf %149, %148 : vector<1x1xf32>
    %151 = vector.extract_strided_slice %142 {offsets = [0, 1], sizes = [1, 4], strides = [1, 1]} : vector<1x5xf32> to vector<1x4xf32>
    %152 = tpu.concatenate %150, %151 in 1 : vector<1x1xf32>, vector<1x4xf32> -> vector<1x5xf32>
    %c0_106 = arith.constant 0 : index
    %c0_107 = arith.constant 0 : index
    %c0_108 = arith.constant 0 : index
    %153 = vector.load %arg9[%c0_106, %c0_107, %c0_108] : memref<1x1x5xf32, #tpu.memory_space<vmem>>, vector<1x1x5xf32>
    %154 = vector.shape_cast %153 : vector<1x1x5xf32> to vector<1x5xf32>
    %155 = vector.shape_cast %152 : vector<1x5xf32> to vector<1x1x5xf32>
    tpu.vector_store %arg9[%c0_106, %c0_107, %c0_108], %155 {strides = array<i32>} : memref<1x1x5xf32, #tpu.memory_space<vmem>>, vector<1x1x5xf32>,
    return
  }
  func.func @transform_0(%arg0: i32) -> (i32, i32, i32, i32) {
    %c0_i32 = arith.constant 0 : i32
    %c0_i32_0 = arith.constant 0 : i32
    %c0_i32_1 = arith.constant 0 : i32
    %c0_i32_2 = arith.constant 0 : i32
    return %arg0, %c0_i32, %c0_i32_0, %c0_i32_1 : i32, i32, i32, i32
  }
  func.func @transform_1(%arg0: i32) -> (i32, i32) {
    %c0_i32 = arith.constant 0 : i32
    %c0_i32_0 = arith.constant 0 : i32
    %c0_i32_1 = arith.constant 0 : i32
    return %c0_i32, %c0_i32_0 : i32, i32
  }
  func.func @transform_2(%arg0: i32) -> (i32, i32) {
    %c0_i32 = arith.constant 0 : i32
    %c0_i32_0 = arith.constant 0 : i32
    %c0_i32_1 = arith.constant 0 : i32
    return %c0_i32, %c0_i32_0 : i32, i32
  }
  func.func @transform_3(%arg0: i32) -> (i32, i32) {
    %c0_i32 = arith.constant 0 : i32
    %c0_i32_0 = arith.constant 0 : i32
    %c0_i32_1 = arith.constant 0 : i32
    return %c0_i32, %c0_i32_0 : i32, i32
  }
  func.func @transform_4(%arg0: i32) -> (i32, i32) {
    %c0_i32 = arith.constant 0 : i32
    %c0_i32_0 = arith.constant 0 : i32
    %c0_i32_1 = arith.constant 0 : i32
    return %c0_i32, %c0_i32_0 : i32, i32
  }
  func.func @transform_5(%arg0: i32) -> (i32, i32) {
    %c0_i32 = arith.constant 0 : i32
    %c0_i32_0 = arith.constant 0 : i32
    %c0_i32_1 = arith.constant 0 : i32
    return %c0_i32, %c0_i32_0 : i32, i32
  }
  func.func @transform_6(%arg0: i32) -> (i32, i32) {
    %c0_i32 = arith.constant 0 : i32
    %c0_i32_0 = arith.constant 0 : i32
    %c0_i32_1 = arith.constant 0 : i32
    return %c0_i32, %c0_i32_0 : i32, i32
  }
  func.func @transform_7(%arg0: i32) -> (i32, i32, i32) {
    %c0_i32 = arith.constant 0 : i32
    %c0_i32_0 = arith.constant 0 : i32
    %c0_i32_1 = arith.constant 0 : i32
    %c0_i32_2 = arith.constant 0 : i32
    return %c0_i32, %c0_i32_0, %c0_i32_1 : i32, i32, i32
  }
  func.func @transform_8(%arg0: i32) -> (i32, i32, i32) {
    %c0_i32 = arith.constant 0 : i32
    %c0_i32_0 = arith.constant 0 : i32
    %c0_i32_1 = arith.constant 0 : i32
    return %arg0, %c0_i32, %c0_i32_0 : i32, i32, i32
  }
}

</mosaic_0001>

<llo_original>
// kernel: discriminator_forward.1
$region0: #{discriminator_forward.1}
  #allocation0 [shape = 'u32[]', space=smem, size = 0x4, offset = 0x4, fixed_abs, tag = 'smem constant byte address 0x4 - core index']
  #allocation1 [shape = 'u32[144,128]{1,0:T(1,128)}', space=vmem, size = 0x12000, scoped, tag = 'internal scratch']
  #allocation2 [shape = 'f32[1,10,8]{2,1,0:T(8,128)}', space=vmem, size = 0x2000, scoped, tag = 'scratch operand']
  #allocation3 [shape = 'f32[1,6,16]{2,1,0:T(8,128)}', space=vmem, size = 0x1000, scoped, tag = 'scratch operand']
  %s0 = inlined_call_operand.vmem [shape: f32[2,1,18,3], index: 0, kind: input, shape index: {}]
  %s1 = inlined_call_operand.vmem [shape: f32[12,8], index: 1, kind: input, shape index: {}]
  %s2 = inlined_call_operand.vmem [shape: f32[2,8], index: 2, kind: input, shape index: {}]
  %s3 = inlined_call_operand.vmem [shape: f32[32,16], index: 3, kind: input, shape index: {}]
  %s4 = inlined_call_operand.vmem [shape: f32[2,16], index: 4, kind: input, shape index: {}]
  %s5 = inlined_call_operand.vmem [shape: f32[64,32], index: 5, kind: input, shape index: {}]
  %s6 = inlined_call_operand.vmem [shape: f32[2,32], index: 6, kind: input, shape index: {}]
  %s7 = inlined_call_operand.vmem [shape: f32[2,32,5], index: 7, kind: input, shape index: {}]
  %s8 = inlined_call_operand.vmem [shape: f32[2,1,5], index: 8, kind: output, shape index: {}]
  %s9 = sld [smem:[#allocation0]]
  $region65: #{discriminator_forward.1} parent=0
    _
  %s11 = ssub.s32 1, %s9
  %s12 = scalar_select 0, %s11, %s9
  loop: start=0, step=1, limit=4
  $region2: #{discriminator_forward.1} parent=0 // loop_pre_header
    _
  $region3: #{discriminator_forward.1} parent=0 // loop_header
    %s14 = sphi 0, %s18
    %p15 = scmp.ge.s32.totalorder %s14, 4
    %s24 = sphi 0, %s26
    %s27 = sphi 0, %s24
    %s28 = sphi 0, %s27
    %s44 = sphi 0, %s28
    %s48 = sphi 0, %s48
    %s50 = sphi 0, %s48
    %s51 = sphi 0, %s50
    %s65 = sphi 0, %s51
    %s69 = sphi 0, %s69
    %s71 = sphi 0, %s69
    %s72 = sphi 0, %s71
    %s86 = sphi 0, %s72
    %s90 = sphi 0, %s90
    %s92 = sphi 0, %s90
    %s93 = sphi 0, %s92
    %s107 = sphi 0, %s93
    %s111 = sphi 0, %s111
    %s113 = sphi 0, %s111
    %s114 = sphi 0, %s113
    %s128 = sphi 0, %s114
    %s132 = sphi 0, %s132
    %s134 = sphi 0, %s132
    %s135 = sphi 0, %s134
    %s149 = sphi 0, %s135
    %s153 = sphi 0, %s153
    %s155 = sphi 0, %s153
    %s156 = sphi 0, %s155
    %s170 = sphi 0, %s156
    %s174 = sphi 0, %s174
    %s176 = sphi 0, %s174
    %s177 = sphi 0, %s176
    %s191 = sphi 0, %s177
    %s197 = sphi 0, %s199
    %s200 = sphi 0, %s197
    %s201 = sphi 0, %s200
    %s217 = sphi 0, %s201
  $region4: #{discriminator_forward.1} parent=0 // loop_header_branch
    %17 = sbr.rel (%p15) target = $region8
  $region5: #{discriminator_forward.1} parent=0 // loop_body
    %s19 = ssub.s32 %s14, 1
    %s20 = ssub.s32 %s14, 2
    %s21 = sadd.s32 %s14, 1
    %s22 = ssub.s32 %s14, %s21
    %p23 = scmp.eq.s32.totalorder %s22, 0
    %s25 = sadd.s32 %s24, 1
    %s26 = scalar_select %p23, %s24, %s25
    %p29 = pneg %p23
    %p30 = scmp.eq.s32.totalorder %s14, 1
    %p31 = por %p29, %p30
    %p32 = scmp.ne.s32.totalorder %s24, %s27
    %p33 = scmp.eq.s32.totalorder %s14, 0
    %p34 = por %p32, %p33
    %p35 = scmp.ne.s32.totalorder %s24, %s27
    %p36 = scmp.eq.s32.totalorder %s19, 1
    %p37 = por %p35, %p36
    %p38 = scmp.ne.s32.totalorder %s27, %s28
    %p39 = scmp.eq.s32.totalorder %s19, 0
    %p40 = por %p38, %p39
    %p41 = scmp.ne.s32.totalorder %s27, %s28
    %p42 = scmp.eq.s32.totalorder %s20, 1
    %p43 = por %p41, %p42
    %p45 = scmp.ne.s32.totalorder %s28, %s44
    %p46 = scmp.eq.s32.totalorder %s20, 0
    %p47 = por %p45, %p46
    %s49 = sadd.s32 %s48, 1
    %p52 = scmp.eq.s32.totalorder %s14, 1
    %p53 = scmp.ne.s32.totalorder %s48, %s50
    %p54 = scmp.eq.s32.totalorder %s14, 0
    %p55 = por %p53, %p54
    %p56 = scmp.ne.s32.totalorder %s48, %s50
    %p57 = scmp.eq.s32.totalorder %s19, 1
    %p58 = por %p56, %p57
    %p59 = scmp.ne.s32.totalorder %s50, %s51
    %p60 = scmp.eq.s32.totalorder %s19, 0
    %p61 = por %p59, %p60
    %p62 = scmp.ne.s32.totalorder %s50, %s51
    %p63 = scmp.eq.s32.totalorder %s20, 1
    %p64 = por %p62, %p63
    %p66 = scmp.ne.s32.totalorder %s51, %s65
    %p67 = scmp.eq.s32.totalorder %s20, 0
    %p68 = por %p66, %p67
    %s70 = sadd.s32 %s69, 1
    %p73 = scmp.eq.s32.totalorder %s14, 1
    %p74 = scmp.ne.s32.totalorder %s69, %s71
    %p75 = scmp.eq.s32.totalorder %s14, 0
    %p76 = por %p74, %p75
    %p77 = scmp.ne.s32.totalorder %s69, %s71
    %p78 = scmp.eq.s32.totalorder %s19, 1
    %p79 = por %p77, %p78
    %p80 = scmp.ne.s32.totalorder %s71, %s72
    %p81 = scmp.eq.s32.totalorder %s19, 0
    %p82 = por %p80, %p81
    %p83 = scmp.ne.s32.totalorder %s71, %s72
    %p84 = scmp.eq.s32.totalorder %s20, 1
    %p85 = por %p83, %p84
    %p87 = scmp.ne.s32.totalorder %s72, %s86
    %p88 = scmp.eq.s32.totalorder %s20, 0
    %p89 = por %p87, %p88
    %s91 = sadd.s32 %s90, 1
    %p94 = scmp.eq.s32.totalorder %s14, 1
    %p95 = scmp.ne.s32.totalorder %s90, %s92
    %p96 = scmp.eq.s32.totalorder %s14, 0
    %p97 = por %p95, %p96
    %p98 = scmp.ne.s32.totalorder %s90, %s92
    %p99 = scmp.eq.s32.totalorder %s19, 1
    %p100 = por %p98, %p99
    %p101 = scmp.ne.s32.totalorder %s92, %s93
    %p102 = scmp.eq.s32.totalorder %s19, 0
    %p103 = por %p101, %p102
    %p104 = scmp.ne.s32.totalorder %s92, %s93
    %p105 = scmp.eq.s32.totalorder %s20, 1
    %p106 = por %p104, %p105
    %p108 = scmp.ne.s32.totalorder %s93, %s107
    %p109 = scmp.eq.s32.totalorder %s20, 0
    %p110 = por %p108, %p109
    %s112 = sadd.s32 %s111, 1
    %p115 = scmp.eq.s32.totalorder %s14, 1
    %p116 = scmp.ne.s32.totalorder %s111, %s113
    %p117 = scmp.eq.s32.totalorder %s14, 0
    %p118 = por %p116, %p117
    %p119 = scmp.ne.s32.totalorder %s111, %s113
    %p120 = scmp.eq.s32.totalorder %s19, 1
    %p121 = por %p119, %p120
    %p122 = scmp.ne.s32.totalorder %s113, %s114
    %p123 = scmp.eq.s32.totalorder %s19, 0
    %p124 = por %p122, %p123
    %p125 = scmp.ne.s32.totalorder %s113, %s114
    %p126 = scmp.eq.s32.totalorder %s20, 1
    %p127 = por %p125, %p126
    %p129 = scmp.ne.s32.totalorder %s114, %s128
    %p130 = scmp.eq.s32.totalorder %s20, 0
    %p131 = por %p129, %p130
    %s133 = sadd.s32 %s132, 1
    %p136 = scmp.eq.s32.totalorder %s14, 1
    %p137 = scmp.ne.s32.totalorder %s132, %s134
    %p138 = scmp.eq.s32.totalorder %s14, 0
    %p139 = por %p137, %p138
    %p140 = scmp.ne.s32.totalorder %s132, %s134
    %p141 = scmp.eq.s32.totalorder %s19, 1
    %p142 = por %p140, %p141
    %p143 = scmp.ne.s32.totalorder %s134, %s135
    %p144 = scmp.eq.s32.totalorder %s19, 0
    %p145 = por %p143, %p144
    %p146 = scmp.ne.s32.totalorder %s134, %s135
    %p147 = scmp.eq.s32.totalorder %s20, 1
    %p148 = por %p146, %p147
    %p150 = scmp.ne.s32.totalorder %s135, %s149
    %p151 = scmp.eq.s32.totalorder %s20, 0
    %p152 = por %p150, %p151
    %s154 = sadd.s32 %s153, 1
    %p157 = scmp.eq.s32.totalorder %s14, 1
    %p158 = scmp.ne.s32.totalorder %s153, %s155
    %p159 = scmp.eq.s32.totalorder %s14, 0
    %p160 = por %p158, %p159
    %p161 = scmp.ne.s32.totalorder %s153, %s155
    %p162 = scmp.eq.s32.totalorder %s19, 1
    %p163 = por %p161, %p162
    %p164 = scmp.ne.s32.totalorder %s155, %s156
    %p165 = scmp.eq.s32.totalorder %s19, 0
    %p166 = por %p164, %p165
    %p167 = scmp.ne.s32.totalorder %s155, %s156
    %p168 = scmp.eq.s32.totalorder %s20, 1
    %p169 = por %p167, %p168
    %p171 = scmp.ne.s32.totalorder %s156, %s170
    %p172 = scmp.eq.s32.totalorder %s20, 0
    %p173 = por %p171, %p172
    %s175 = sadd.s32 %s174, 1
    %p178 = scmp.eq.s32.totalorder %s14, 1
    %p179 = scmp.ne.s32.totalorder %s174, %s176
    %p180 = scmp.eq.s32.totalorder %s14, 0
    %p181 = por %p179, %p180
    %p182 = scmp.ne.s32.totalorder %s174, %s176
    %p183 = scmp.eq.s32.totalorder %s19, 1
    %p184 = por %p182, %p183
    %p185 = scmp.ne.s32.totalorder %s176, %s177
    %p186 = scmp.eq.s32.totalorder %s19, 0
    %p187 = por %p185, %p186
    %p188 = scmp.ne.s32.totalorder %s176, %s177
    %p189 = scmp.eq.s32.totalorder %s20, 1
    %p190 = por %p188, %p189
    %p192 = scmp.ne.s32.totalorder %s177, %s191
    %p193 = scmp.eq.s32.totalorder %s20, 0
    %p194 = por %p192, %p193
    %s195 = ssub.s32 %s14, %s21
    %p196 = scmp.eq.s32.totalorder %s195, 0
    %s198 = sadd.s32 %s197, 1
    %s199 = scalar_select %p196, %s197, %s198
    %p202 = pneg %p196
    %p203 = scmp.eq.s32.totalorder %s14, 1
    %p204 = por %p202, %p203
    %p205 = scmp.ne.s32.totalorder %s197, %s200
    %p206 = scmp.eq.s32.totalorder %s14, 0
    %p207 = por %p205, %p206
    %p208 = scmp.ne.s32.totalorder %s197, %s200
    %p209 = scmp.eq.s32.totalorder %s19, 1
    %p210 = por %p208, %p209
    %p211 = scmp.ne.s32.totalorder %s200, %s201
    %p212 = scmp.eq.s32.totalorder %s19, 0
    %p213 = por %p211, %p212
    %p214 = scmp.ne.s32.totalorder %s200, %s201
    %p215 = scmp.eq.s32.totalorder %s20, 1
    %p216 = por %p214, %p215
    %p218 = scmp.ne.s32.totalorder %s201, %s217
    %p219 = scmp.eq.s32.totalorder %s20, 0
    %p220 = por %p218, %p219
    %p221 = scmp.le.s32.totalorder 1, %s14
    %p222 = scmp.lt.s32.totalorder %s14, 3
    %p223 = pnand %p221, %p222
    %p224 = pneg %p223
    // Predicated region
    $region9: #{discriminator_forward.1} parent=5 // pred_check
      _
    $region10: #{discriminator_forward.1} parent=5 // pred_check_branch
      %226 = sbr.rel (%p223) target = $region12
    $region11: #{discriminator_forward.1} parent=5 // pred_region
      %s227 = ssub.s32 %s14, 1
      // Predicated region
      $region13: #{discriminator_forward.1} parent=11 // pred_check
        %p228 = pneg %p61
      $region14: #{discriminator_forward.1} parent=11 // pred_check_branch
        %230 = sbr.rel (%p228) target = $region16
      $region15: #{discriminator_forward.1} parent=11 // pred_region
        _
      $region16: #{discriminator_forward.1} parent=11 // pred_fallthru
        _
      // Predicated region
      $region17: #{discriminator_forward.1} parent=11 // pred_check
        %p231 = pneg %p82
      $region18: #{discriminator_forward.1} parent=11 // pred_check_branch
        %233 = sbr.rel (%p231) target = $region20
      $region19: #{discriminator_forward.1} parent=11 // pred_region
        _
      $region20: #{discriminator_forward.1} parent=11 // pred_fallthru
        _
      // Predicated region
      $region21: #{discriminator_forward.1} parent=11 // pred_check
        %p234 = pneg %p103
      $region22: #{discriminator_forward.1} parent=11 // pred_check_branch
        %236 = sbr.rel (%p234) target = $region24
      $region23: #{discriminator_forward.1} parent=11 // pred_region
        _
      $region24: #{discriminator_forward.1} parent=11 // pred_fallthru
        _
      // Predicated region
      $region25: #{discriminator_forward.1} parent=11 // pred_check
        %p237 = pneg %p124
      $region26: #{discriminator_forward.1} parent=11 // pred_check_branch
        %239 = sbr.rel (%p237) target = $region28
      $region27: #{discriminator_forward.1} parent=11 // pred_region
        _
      $region28: #{discriminator_forward.1} parent=11 // pred_fallthru
        _
      // Predicated region
      $region29: #{discriminator_forward.1} parent=11 // pred_check
        %p240 = pneg %p145
      $region30: #{discriminator_forward.1} parent=11 // pred_check_branch
        %242 = sbr.rel (%p240) target = $region32
      $region31: #{discriminator_forward.1} parent=11 // pred_region
        _
      $region32: #{discriminator_forward.1} parent=11 // pred_fallthru
        _
      // Predicated region
      $region33: #{discriminator_forward.1} parent=11 // pred_check
        %p243 = pneg %p166
      $region34: #{discriminator_forward.1} parent=11 // pred_check_branch
        %245 = sbr.rel (%p243) target = $region36
      $region35: #{discriminator_forward.1} parent=11 // pred_region
        _
      $region36: #{discriminator_forward.1} parent=11 // pred_fallthru
        _
      // Predicated region
      $region37: #{discriminator_forward.1} parent=11 // pred_check
        %p246 = pneg %p187
      $region38: #{discriminator_forward.1} parent=11 // pred_check_branch
        %248 = sbr.rel (%p246) target = $region40
      $region39: #{discriminator_forward.1} parent=11 // pred_region
        _
      $region40: #{discriminator_forward.1} parent=11 // pred_fallthru
        _
    $region12: #{discriminator_forward.1} parent=5 // pred_fallthru
      _
    %p249 = scmp.lt.s32.totalorder %s14, 2
    // Predicated region
    $region41: #{discriminator_forward.1} parent=5 // pred_check
      %p250 = pneg %p249
    $region42: #{discriminator_forward.1} parent=5 // pred_check_branch
      %252 = sbr.rel (%p250) target = $region44
    $region43: #{discriminator_forward.1} parent=5 // pred_region
      // Predicated region
      $region45: #{discriminator_forward.1} parent=43 // pred_check
        %p253 = pneg %p34
      $region46: #{discriminator_forward.1} parent=43 // pred_check_branch
        %255 = sbr.rel (%p253) target = $region48
      $region47: #{discriminator_forward.1} parent=43 // pred_region
        %p256 = scmp.lt.s32.totalorder %s14, 1
        %s257 = scalar_select %p256, %s14, 1
        %s258 = smul.addr %s257, 3
        %s259 = smul.addr %s258, 8
        %s260 = scalar_lea.vmem %s0, %s259
      $region48: #{discriminator_forward.1} parent=43 // pred_fallthru
        _
    $region44: #{discriminator_forward.1} parent=5 // pred_fallthru
      _
    %p261 = scmp.le.s32.totalorder 1, %s14
    %p262 = scmp.lt.s32.totalorder %s14, 3
    %p263 = pnand %p261, %p262
    %p264 = pneg %p263
    // Predicated region
    $region49: #{discriminator_forward.1} parent=5 // pred_check
      _
    $region50: #{discriminator_forward.1} parent=5 // pred_check_branch
      %266 = sbr.rel (%p263) target = $region52
    $region51: #{discriminator_forward.1} parent=5 // pred_region
      %s267 = ssub.s32 %s14, 1
      %p268 = scmp.lt.s32.totalorder %s19, 1
      %s269 = scalar_select %p268, %s19, 1
      %s270 = smul.addr %s269, 3
      %s271 = smul.addr %s270, 8
      %s272 = scalar_lea.vmem %s0, %s271
      %p273 = pneg %p40
      %p274 = pneg %p37
      %p275 = pneg %p61
      %p276 = pneg %p58
      %p277 = pneg %p82
      %p278 = pneg %p79
      %p279 = pneg %p103
      %p280 = pneg %p100
      %p281 = pneg %p124
      %p282 = pneg %p121
      %p283 = pneg %p145
      %p284 = pneg %p142
      %p285 = pneg %p166
      %p286 = pneg %p163
      %p287 = pneg %p187
      %p288 = pneg %p184
      %p289 = pneg %p213
      %p290 = pneg %p210
      %p291 = scmp.lt.s32.totalorder %s19, 1
      %s292 = scalar_select %p291, %s19, 1
      %s293 = scalar_lea.vmem %s8, %s292
      %p294 = scmp.lt.s32.totalorder %s19, 1
      %s295 = scalar_select %p294, %s19, 1
      %s296 = smul.addr %s295, 3
      %s297 = smul.addr %s296, 8
      %s298 = scalar_lea.vmem %s0, %s297
      %p299 = scmp.lt.s32.totalorder %s19, 1
      %s300 = scalar_select %p299, %s19, 1
      %s301 = scalar_lea.vmem %s8, %s300
      %v302 = vld [vmem:[%s298] ss:$2 sm:$0xff]
      %s303 = scalar_lea.vmem %s298, 1
      %v304 = vld [vmem:[%s303] ss:$2 sm:$0xff]
      %s305 = scalar_lea.vmem %s298, 2
      %v306 = vld [vmem:[%s305] ss:$2 sm:$0xff]
      %s307 = scalar_lea.vmem %s298, 3
      %v308 = vld [vmem:[%s307] ss:$2 sm:$0xff]
      %310 = vrot.lane.b32.xlu0 %v304, 3
      %v311 = vpop.permute.xlu0 %310
      %314 = vrot.lane.b32.xlu0 %v306, 6
      %v315 = vpop.permute.xlu0 %314
      %318 = vrot.lane.b32.xlu0 %v308, 9
      %v319 = vpop.permute.xlu0 %318
      %vm321 = vcmask 23552
      %v322 = vsel %vm321, %v302, %v311
      %vm323 = vcmask 48128
      %v324 = vsel %vm323, %v322, %v315
      %vm325 = vcmask 72704
      %v326 = vsel %vm325, %v324, %v319
      %v327 = vld [vmem:[%s1] sm:$0xff]
      %v328 = vld [vmem:[%s1 + $0x8] sm:$0xf]
      %vm329 = vcmask 97280
      %v331 = vsel %vm329, %v326, 0
      %vm333 = vcmask 1043456
      %v335 = vsel %vm333, %v328, 0
      %337 = vmatprep.subr.mxu0 0.0
      %338 = vmatpush1.msra.mxu0 0.0
      %339 = vmatprep.subr.mxu0 0.0
      %340 = vmatpush1.msra.mxu0 0.0
      %341 = vmatprep.subr.mxu0 0.0
      %342 = vmatpush1.msra.mxu0 0.0
      %343 = vmatprep.subr.mxu0 0.0
      %344 = vmatpush1.msra.mxu0 0.0
      %345 = vmatprep.subr.mxu0 0.0
      %346 = vmatpush1.msra.mxu0 0.0
      %347 = vmatprep.subr.mxu0 0.0
      %348 = vmatpush1.msra.mxu0 0.0
      %349 = vmatprep.subr.mxu0 0.0
      %350 = vmatpush1.msra.mxu0 0.0
      %351 = vmatprep.subr.mxu0 0.0
      %352 = vmatpush1.msra.mxu0 0.0
      %353 = vmatprep.subr.mxu0 0.0
      %354 = vmatpush1.msra.mxu0 0.0
      %355 = vmatprep.subr.mxu0 0.0
      %356 = vmatpush1.msra.mxu0 0.0
      %357 = vmatprep.subr.mxu0 0.0
      %358 = vmatpush1.msra.mxu0 0.0
      %359 = vmatprep.subr.mxu0 0.0
      %360 = vmatpush1.msra.mxu0 0.0
      %361 = vmatprep.subr.mxu0 0.0
      %362 = vmatpush1.msra.mxu0 0.0
      %363 = vmatprep.subr.mxu0 0.0
      %364 = vmatpush1.msra.mxu0 0.0
      %365 = vmatprep.subr.mxu0 0.0
      %366 = vmatpush1.msra.mxu0 %v335
      %367 = vmatprep.subr.mxu0 0.0
      %368 = vmatpush1.msra.mxu0 %v327
      %369 = vmatprep.subr.mxu0 0.0
      %370 = vmatpush2.msra.mxu0 0.0
      %371 = vmatprep.subr.mxu0 0.0
      %372 = vmatpush2.msra.mxu0 0.0
      %373 = vmatprep.subr.mxu0 0.0
      %374 = vmatpush2.msra.mxu0 0.0
      %375 = vmatprep.subr.mxu0 0.0
      %376 = vmatpush2.msra.mxu0 0.0
      %377 = vmatprep.subr.mxu0 0.0
      %378 = vmatpush2.msra.mxu0 0.0
      %379 = vmatprep.subr.mxu0 0.0
      %380 = vmatpush2.msra.mxu0 0.0
      %381 = vmatprep.subr.mxu0 0.0
      %382 = vmatpush2.msra.mxu0 0.0
      %383 = vmatprep.subr.mxu0 0.0
      %384 = vmatpush2.msra.mxu0 0.0
      %385 = vmatprep.subr.mxu0 0.0
      %386 = vmatpush2.msra.mxu0 0.0
      %387 = vmatprep.subr.mxu0 0.0
      %388 = vmatpush2.msra.mxu0 0.0
      %389 = vmatprep.subr.mxu0 0.0
      %390 = vmatpush2.msra.mxu0 0.0
      %391 = vmatprep.subr.mxu0 0.0
      %392 = vmatpush2.msra.mxu0 0.0
      %393 = vmatprep.subr.mxu0 0.0
      %394 = vmatpush2.msra.mxu0 0.0
      %395 = vmatprep.subr.mxu0 0.0
      %396 = vmatpush2.msra.mxu0 0.0
      %397 = vmatprep.subr.mxu0 0.0
      %398 = vmatpush2.msra.mxu0 0.0
      %399 = vmatprep.subr.mxu0 0.0
      %400 = vmatpush2.msra.mxu0 0.0
      %401 = vmatprep.mubr.f32.mxu0 0.0
      %402 = vmatmul.mubr.f32.gmra.mxu0 %v331
      %v403 = vpop.f32.mrf.mxu0
      %v404 = vadd.f32 0.0, %v403
      %v405 = vpop.f32.mrf.mxu0
      %406 = vdwg.mxu0
      %vm407 = vcmask 64512
      %v408 = vsel %vm407, %v404, 0.0
      %v409 = vrot.slane %v408, 4
      %v410 = vadd.f32 %v408, %v409
      %v411 = vrot.slane %v410, 2
      %v412 = vadd.f32 %v410, %v411
      %v413 = vrot.slane %v412, 1
      %v414 = vadd.f32 %v412, %v413
      %v415 = vrcp.pop 8.0
      %v416 = vmul.f32 %v414, %v415
      %v417 = vsub.f32 %v404, %v416
      %v418 = vmul.f32 %v417, %v417
      %v419 = vsel %vm407, %v418, 0.0
      %v420 = vrot.slane %v419, 4
      %v421 = vadd.f32 %v419, %v420
      %v422 = vrot.slane %v421, 2
      %v423 = vadd.f32 %v421, %v422
      %v424 = vrot.slane %v423, 1
      %v425 = vadd.f32 %v423, %v424
      %v426 = vmul.f32 %v425, %v415
      %v427 = vadd.f32 %v426, 1e-05
      %v428 = vrsqrt.pop %v427
      %v429 = vmul.f32 %v417, %v428
      %v430 = vld [vmem:[%s2] sm:$0x1]
      %v431 = vlaneseq
      %v432 = vshrl.u32 %v431, 7
      %v433 = vsub.s32 0, %v432
      %v434 = vrot.slane %v430, %v433
      %v435 = vmul.f32 %v429, %v434
      %v436 = vld [vmem:[%s2 + $0x1] sm:$0x1]
      %v437 = vlaneseq
      %v438 = vshrl.u32 %v437, 7
      %v439 = vsub.s32 0, %v438
      %v440 = vrot.slane %v436, %v439
      %v441 = vadd.f32 %v435, %v440
      %vm442 = vcmp.ge.f32.partialorder %v441, 0.0
      %v443 = vmul.f32 %v441, 0.01
      %v444 = vsel %vm442, %v441, %v443
      %vm445 = vcmask 57344
      %446 = vst.msk [vmem:[#allocation2] sm:$0x1] %vm445, 0.0
      %447 = vst.msk [vmem:[#allocation2 + $0x9] sm:$0x1] %vm445, 0.0
      %448 = vst.msk [vmem:[#allocation2 + $0x1] sm:$0xff] %vm407, %v444
      %v449 = vld [vmem:[#allocation2] ss:$2 sm:$0xf]
      %s450 = scalar_lea.vmem [#allocation2], 1
      %v451 = vld [vmem:[%s450] ss:$2 sm:$0xf]
      %s452 = scalar_lea.vmem [#allocation2], 2
      %v453 = vld [vmem:[%s452] ss:$2 sm:$0xf]
      %s454 = scalar_lea.vmem [#allocation2], 3
      %v455 = vld [vmem:[%s454] ss:$2 sm:$0xf]
      %457 = vrot.lane.b32.xlu0 %v451, 8
      %v458 = vpop.permute.xlu0 %457
      %461 = vrot.lane.b32.xlu0 %v453, 16
      %v462 = vpop.permute.xlu0 %461
      %465 = vrot.lane.b32.xlu0 %v455, 24
      %v466 = vpop.permute.xlu0 %465
      %v468 = vsel %vm407, %v449, %v458
      %vm469 = vcmask 130048
      %v470 = vsel %vm469, %v468, %v462
      %vm471 = vcmask 195584
      %v472 = vsel %vm471, %v470, %v466
      %v473 = vld [vmem:[%s3] sm:$0xff]
      %v474 = vld [vmem:[%s3 + $0x8] sm:$0xff]
      %v475 = vld [vmem:[%s3 + $0x10] sm:$0xff]
      %v476 = vld [vmem:[%s3 + $0x18] sm:$0xff]
      %vm477 = vcmask 261120
      %v479 = vsel %vm477, %v472, 0
      %481 = vmatprep.subr.mxu0 0.0
      %482 = vmatpush1.msra.mxu0 0.0
      %483 = vmatprep.subr.mxu0 0.0
      %484 = vmatpush1.msra.mxu0 0.0
      %485 = vmatprep.subr.mxu0 0.0
      %486 = vmatpush1.msra.mxu0 0.0
      %487 = vmatprep.subr.mxu0 0.0
      %488 = vmatpush1.msra.mxu0 0.0
      %489 = vmatprep.subr.mxu0 0.0
      %490 = vmatpush1.msra.mxu0 0.0
      %491 = vmatprep.subr.mxu0 0.0
      %492 = vmatpush1.msra.mxu0 0.0
      %493 = vmatprep.subr.mxu0 0.0
      %494 = vmatpush1.msra.mxu0 0.0
      %495 = vmatprep.subr.mxu0 0.0
      %496 = vmatpush1.msra.mxu0 0.0
      %497 = vmatprep.subr.mxu0 0.0
      %498 = vmatpush1.msra.mxu0 0.0
      %499 = vmatprep.subr.mxu0 0.0
      %500 = vmatpush1.msra.mxu0 0.0
      %501 = vmatprep.subr.mxu0 0.0
      %502 = vmatpush1.msra.mxu0 0.0
      %503 = vmatprep.subr.mxu0 0.0
      %504 = vmatpush1.msra.mxu0 0.0
      %505 = vmatprep.subr.mxu0 0.0
      %506 = vmatpush1.msra.mxu0 %v476
      %507 = vmatprep.subr.mxu0 0.0
      %508 = vmatpush1.msra.mxu0 %v475
      %509 = vmatprep.subr.mxu0 0.0
      %510 = vmatpush1.msra.mxu0 %v474
      %511 = vmatprep.subr.mxu0 0.0
      %512 = vmatpush1.msra.mxu0 %v473
      %513 = vmatprep.subr.mxu0 0.0
      %514 = vmatpush2.msra.mxu0 0.0
      %515 = vmatprep.subr.mxu0 0.0
      %516 = vmatpush2.msra.mxu0 0.0
      %517 = vmatprep.subr.mxu0 0.0
      %518 = vmatpush2.msra.mxu0 0.0
      %519 = vmatprep.subr.mxu0 0.0
      %520 = vmatpush2.msra.mxu0 0.0
      %521 = vmatprep.subr.mxu0 0.0
      %522 = vmatpush2.msra.mxu0 0.0
      %523 = vmatprep.subr.mxu0 0.0
      %524 = vmatpush2.msra.mxu0 0.0
      %525 = vmatprep.subr.mxu0 0.0
      %526 = vmatpush2.msra.mxu0 0.0
      %527 = vmatprep.subr.mxu0 0.0
      %528 = vmatpush2.msra.mxu0 0.0
      %529 = vmatprep.subr.mxu0 0.0
      %530 = vmatpush2.msra.mxu0 0.0
      %531 = vmatprep.subr.mxu0 0.0
      %532 = vmatpush2.msra.mxu0 0.0
      %533 = vmatprep.subr.mxu0 0.0
      %534 = vmatpush2.msra.mxu0 0.0
      %535 = vmatprep.subr.mxu0 0.0
      %536 = vmatpush2.msra.mxu0 0.0
      %537 = vmatprep.subr.mxu0 0.0
      %538 = vmatpush2.msra.mxu0 0.0
      %539 = vmatprep.subr.mxu0 0.0
      %540 = vmatpush2.msra.mxu0 0.0
      %541 = vmatprep.subr.mxu0 0.0
      %542 = vmatpush2.msra.mxu0 0.0
      %543 = vmatprep.subr.mxu0 0.0
      %544 = vmatpush2.msra.mxu0 0.0
      %545 = vmatprep.mubr.f32.mxu0 0.0
      %546 = vmatmul.mubr.f32.gmra.mxu0 %v479
      %v547 = vpop.f32.mrf.mxu0
      %v548 = vadd.f32 0.0, %v547
      %v549 = vpop.f32.mrf.mxu0
      %550 = vdwg.mxu0
      %vm551 = vcmask 125952
      %v552 = vsel %vm551, %v548, 0.0
      %v553 = vrot.slane %v552, 4
      %v554 = vadd.f32 %v552, %v553
      %v555 = vrot.slane %v554, 2
      %v556 = vadd.f32 %v554, %v555
      %v557 = vrot.slane %v556, 1
      %v558 = vadd.f32 %v556, %v557
      %v559 = vrcp.pop 4.0
      %v560 = vmul.f32 %v558, %v559
      %v561 = vsub.f32 %v548, %v560
      %v562 = vmul.f32 %v561, %v561
      %v563 = vsel %vm551, %v562, 0.0
      %v564 = vrot.slane %v563, 4
      %v565 = vadd.f32 %v563, %v564
      %v566 = vrot.slane %v565, 2
      %v567 = vadd.f32 %v565, %v566
      %v568 = vrot.slane %v567, 1
      %v569 = vadd.f32 %v567, %v568
      %v570 = vmul.f32 %v569, %v559
      %v571 = vadd.f32 %v570, 1e-05
      %v572 = vrsqrt.pop %v571
      %v573 = vmul.f32 %v561, %v572
      %v574 = vld [vmem:[%s4] sm:$0x1]
      %v575 = vlaneseq
      %v576 = vshrl.u32 %v575, 7
      %v577 = vsub.s32 0, %v576
      %v578 = vrot.slane %v574, %v577
      %v579 = vmul.f32 %v573, %v578
      %v580 = vld [vmem:[%s4 + $0x1] sm:$0x1]
      %v581 = vlaneseq
      %v582 = vshrl.u32 %v581, 7
      %v583 = vsub.s32 0, %v582
      %v584 = vrot.slane %v580, %v583
      %v585 = vadd.f32 %v579, %v584
      %vm586 = vcmp.ge.f32.partialorder %v585, 0.0
      %v587 = vmul.f32 %v585, 0.01
      %v588 = vsel %vm586, %v585, %v587
      %vm589 = vcmask 122880
      %590 = vst.msk [vmem:[#allocation3] sm:$0x1] %vm589, 0.0
      %591 = vst.msk [vmem:[#allocation3 + $0x5] sm:$0x1] %vm589, 0.0
      %592 = vst.msk [vmem:[#allocation3 + $0x1] sm:$0xf] %vm551, %v588
      %v593 = vld [vmem:[#allocation3] ss:$2 sm:$0x3]
      %s594 = scalar_lea.vmem [#allocation3], 1
      %v595 = vld [vmem:[%s594] ss:$2 sm:$0x3]
      %s596 = scalar_lea.vmem [#allocation3], 2
      %v597 = vld [vmem:[%s596] ss:$2 sm:$0x3]
      %s598 = scalar_lea.vmem [#allocation3], 3
      %v599 = vld [vmem:[%s598] ss:$2 sm:$0x3]
      %601 = vrot.lane.b32.xlu0 %v595, 16
      %v602 = vpop.permute.xlu0 %601
      %605 = vrot.lane.b32.xlu0 %v597, 32
      %v606 = vpop.permute.xlu0 %605
      %609 = vrot.lane.b32.xlu0 %v599, 48
      %v610 = vpop.permute.xlu0 %609
      %v612 = vsel %vm469, %v593, %v602
      %v613 = vsel %vm477, %v612, %v606
      %vm614 = vcmask 392192
      %v615 = vsel %vm614, %v613, %v610
      %v616 = vld [vmem:[%s5] sm:$0xff]
      %v617 = vld [vmem:[%s5 + $0x8] sm:$0xff]
      %v618 = vld [vmem:[%s5 + $0x10] sm:$0xff]
      %v619 = vld [vmem:[%s5 + $0x18] sm:$0xff]
      %v620 = vld [vmem:[%s5 + $0x20] sm:$0xff]
      %v621 = vld [vmem:[%s5 + $0x28] sm:$0xff]
      %v622 = vld [vmem:[%s5 + $0x30] sm:$0xff]
      %v623 = vld [vmem:[%s5 + $0x38] sm:$0xff]
      %vm624 = vcmask 523264
      %v626 = vsel %vm624, %v615, 0
      %628 = vmatprep.subr.mxu0 0.0
      %629 = vmatpush1.msra.mxu0 0.0
      %630 = vmatprep.subr.mxu0 0.0
      %631 = vmatpush1.msra.mxu0 0.0
      %632 = vmatprep.subr.mxu0 0.0
      %633 = vmatpush1.msra.mxu0 0.0
      %634 = vmatprep.subr.mxu0 0.0
      %635 = vmatpush1.msra.mxu0 0.0
      %636 = vmatprep.subr.mxu0 0.0
      %637 = vmatpush1.msra.mxu0 0.0
      %638 = vmatprep.subr.mxu0 0.0
      %639 = vmatpush1.msra.mxu0 0.0
      %640 = vmatprep.subr.mxu0 0.0
      %641 = vmatpush1.msra.mxu0 0.0
      %642 = vmatprep.subr.mxu0 0.0
      %643 = vmatpush1.msra.mxu0 0.0
      %644 = vmatprep.subr.mxu0 0.0
      %645 = vmatpush1.msra.mxu0 %v623
      %646 = vmatprep.subr.mxu0 0.0
      %647 = vmatpush1.msra.mxu0 %v622
      %648 = vmatprep.subr.mxu0 0.0
      %649 = vmatpush1.msra.mxu0 %v621
      %650 = vmatprep.subr.mxu0 0.0
      %651 = vmatpush1.msra.mxu0 %v620
      %652 = vmatprep.subr.mxu0 0.0
      %653 = vmatpush1.msra.mxu0 %v619
      %654 = vmatprep.subr.mxu0 0.0
      %655 = vmatpush1.msra.mxu0 %v618
      %656 = vmatprep.subr.mxu0 0.0
      %657 = vmatpush1.msra.mxu0 %v617
      %658 = vmatprep.subr.mxu0 0.0
      %659 = vmatpush1.msra.mxu0 %v616
      %660 = vmatprep.subr.mxu0 0.0
      %661 = vmatpush2.msra.mxu0 0.0
      %662 = vmatprep.subr.mxu0 0.0
      %663 = vmatpush2.msra.mxu0 0.0
      %664 = vmatprep.subr.mxu0 0.0
      %665 = vmatpush2.msra.mxu0 0.0
      %666 = vmatprep.subr.mxu0 0.0
      %667 = vmatpush2.msra.mxu0 0.0
      %668 = vmatprep.subr.mxu0 0.0
      %669 = vmatpush2.msra.mxu0 0.0
      %670 = vmatprep.subr.mxu0 0.0
      %671 = vmatpush2.msra.mxu0 0.0
      %672 = vmatprep.subr.mxu0 0.0
      %673 = vmatpush2.msra.mxu0 0.0
      %674 = vmatprep.subr.mxu0 0.0
      %675 = vmatpush2.msra.mxu0 0.0
      %676 = vmatprep.subr.mxu0 0.0
      %677 = vmatpush2.msra.mxu0 0.0
      %678 = vmatprep.subr.mxu0 0.0
      %679 = vmatpush2.msra.mxu0 0.0
      %680 = vmatprep.subr.mxu0 0.0
      %681 = vmatpush2.msra.mxu0 0.0
      %682 = vmatprep.subr.mxu0 0.0
      %683 = vmatpush2.msra.mxu0 0.0
      %684 = vmatprep.subr.mxu0 0.0
      %685 = vmatpush2.msra.mxu0 0.0
      %686 = vmatprep.subr.mxu0 0.0
      %687 = vmatpush2.msra.mxu0 0.0
      %688 = vmatprep.subr.mxu0 0.0
      %689 = vmatpush2.msra.mxu0 0.0
      %690 = vmatprep.subr.mxu0 0.0
      %691 = vmatpush2.msra.mxu0 0.0
      %692 = vmatprep.mubr.f32.mxu0 0.0
      %693 = vmatmul.mubr.f32.gmra.mxu0 %v626
      %v694 = vpop.f32.mrf.mxu0
      %v695 = vadd.f32 0.0, %v694
      %v696 = vpop.f32.mrf.mxu0
      %697 = vdwg.mxu0
      %vm698 = vcmask 254976
      %v699 = vsel %vm698, %v695, 0.0
      %v700 = vrot.slane %v699, 4
      %v701 = vadd.f32 %v699, %v700
      %v702 = vrot.slane %v701, 2
      %v703 = vadd.f32 %v701, %v702
      %v704 = vrot.slane %v703, 1
      %v705 = vadd.f32 %v703, %v704
      %v706 = vrcp.pop 2.0
      %v707 = vmul.f32 %v705, %v706
      %v708 = vsub.f32 %v695, %v707
      %v709 = vmul.f32 %v708, %v708
      %v710 = vsel %vm698, %v709, 0.0
      %v711 = vrot.slane %v710, 4
      %v712 = vadd.f32 %v710, %v711
      %v713 = vrot.slane %v712, 2
      %v714 = vadd.f32 %v712, %v713
      %v715 = vrot.slane %v714, 1
      %v716 = vadd.f32 %v714, %v715
      %v717 = vmul.f32 %v716, %v706
      %v718 = vadd.f32 %v717, 1e-05
      %v719 = vrsqrt.pop %v718
      %v720 = vmul.f32 %v708, %v719
      %v721 = vld [vmem:[%s6] sm:$0x1]
      %v722 = vlaneseq
      %v723 = vshrl.u32 %v722, 7
      %v724 = vsub.s32 0, %v723
      %v725 = vrot.slane %v721, %v724
      %v726 = vmul.f32 %v720, %v725
      %v727 = vld [vmem:[%s6 + $0x1] sm:$0x1]
      %v728 = vlaneseq
      %v729 = vshrl.u32 %v728, 7
      %v730 = vsub.s32 0, %v729
      %v731 = vrot.slane %v727, %v730
      %v732 = vadd.f32 %v726, %v731
      %vm733 = vcmp.ge.f32.partialorder %v732, 0.0
      %v734 = vmul.f32 %v732, 0.01
      %v735 = vsel %vm733, %v732, %v734
      %v736 = vld [vmem:[%s7] sm:$0xff]
      %v737 = vld [vmem:[%s7 + $0x8] sm:$0xff]
      %v738 = vld [vmem:[%s7 + $0x10] sm:$0xff]
      %v739 = vld [vmem:[%s7 + $0x18] sm:$0xff]
      %s740 = scalar_lea.vmem %s7, 32
      %v741 = vld [vmem:[%s740] sm:$0xff]
      %v742 = vld [vmem:[%s740 + $0x8] sm:$0xff]
      %v743 = vld [vmem:[%s740 + $0x10] sm:$0xff]
      %v744 = vld [vmem:[%s740 + $0x18] sm:$0xff]
      %v746 = vrot.slane %v735, 1
      %v747 = vsel %vm477, %v746, 0
      %749 = vmatprep.subr.mxu0 0.0
      %750 = vmatpush1.msra.mxu0 0.0
      %751 = vmatprep.subr.mxu0 0.0
      %752 = vmatpush1.msra.mxu0 0.0
      %753 = vmatprep.subr.mxu0 0.0
      %754 = vmatpush1.msra.mxu0 0.0
      %755 = vmatprep.subr.mxu0 0.0
      %756 = vmatpush1.msra.mxu0 0.0
      %757 = vmatprep.subr.mxu0 0.0
      %758 = vmatpush1.msra.mxu0 0.0
      %759 = vmatprep.subr.mxu0 0.0
      %760 = vmatpush1.msra.mxu0 0.0
      %761 = vmatprep.subr.mxu0 0.0
      %762 = vmatpush1.msra.mxu0 0.0
      %763 = vmatprep.subr.mxu0 0.0
      %764 = vmatpush1.msra.mxu0 0.0
      %765 = vmatprep.subr.mxu0 0.0
      %766 = vmatpush1.msra.mxu0 0.0
      %767 = vmatprep.subr.mxu0 0.0
      %768 = vmatpush1.msra.mxu0 0.0
      %769 = vmatprep.subr.mxu0 0.0
      %770 = vmatpush1.msra.mxu0 0.0
      %771 = vmatprep.subr.mxu0 0.0
      %772 = vmatpush1.msra.mxu0 0.0
      %773 = vmatprep.subr.mxu0 0.0
      %774 = vmatpush1.msra.mxu0 %v744
      %775 = vmatprep.subr.mxu0 0.0
      %776 = vmatpush1.msra.mxu0 %v743
      %777 = vmatprep.subr.mxu0 0.0
      %778 = vmatpush1.msra.mxu0 %v742
      %779 = vmatprep.subr.mxu0 0.0
      %780 = vmatpush1.msra.mxu0 %v741
      %781 = vmatprep.subr.mxu0 0.0
      %782 = vmatpush2.msra.mxu0 0.0
      %783 = vmatprep.subr.mxu0 0.0
      %784 = vmatpush2.msra.mxu0 0.0
      %785 = vmatprep.subr.mxu0 0.0
      %786 = vmatpush2.msra.mxu0 0.0
      %787 = vmatprep.subr.mxu0 0.0
      %788 = vmatpush2.msra.mxu0 0.0
      %789 = vmatprep.subr.mxu0 0.0
      %790 = vmatpush2.msra.mxu0 0.0
      %791 = vmatprep.subr.mxu0 0.0
      %792 = vmatpush2.msra.mxu0 0.0
      %793 = vmatprep.subr.mxu0 0.0
      %794 = vmatpush2.msra.mxu0 0.0
      %795 = vmatprep.subr.mxu0 0.0
      %796 = vmatpush2.msra.mxu0 0.0
      %797 = vmatprep.subr.mxu0 0.0
      %798 = vmatpush2.msra.mxu0 0.0
      %799 = vmatprep.subr.mxu0 0.0
      %800 = vmatpush2.msra.mxu0 0.0
      %801 = vmatprep.subr.mxu0 0.0
      %802 = vmatpush2.msra.mxu0 0.0
      %803 = vmatprep.subr.mxu0 0.0
      %804 = vmatpush2.msra.mxu0 0.0
      %805 = vmatprep.subr.mxu0 0.0
      %806 = vmatpush2.msra.mxu0 0.0
      %807 = vmatprep.subr.mxu0 0.0
      %808 = vmatpush2.msra.mxu0 0.0
      %809 = vmatprep.subr.mxu0 0.0
      %810 = vmatpush2.msra.mxu0 0.0
      %811 = vmatprep.subr.mxu0 0.0
      %812 = vmatpush2.msra.mxu0 0.0
      %813 = vmatprep.mubr.f32.mxu0 0.0
      %814 = vmatmul.mubr.f32.gmra.mxu0 %v747
      %v815 = vpop.f32.mrf.mxu0
      %v816 = vadd.f32 0.0, %v815
      %v817 = vpop.f32.mrf.mxu0
      %818 = vdwg.mxu0
      %v819 = vsel %vm477, %v735, 0
      %821 = vmatprep.subr.mxu0 0.0
      %822 = vmatpush1.msra.mxu0 0.0
      %823 = vmatprep.subr.mxu0 0.0
      %824 = vmatpush1.msra.mxu0 0.0
      %825 = vmatprep.subr.mxu0 0.0
      %826 = vmatpush1.msra.mxu0 0.0
      %827 = vmatprep.subr.mxu0 0.0
      %828 = vmatpush1.msra.mxu0 0.0
      %829 = vmatprep.subr.mxu0 0.0
      %830 = vmatpush1.msra.mxu0 0.0
      %831 = vmatprep.subr.mxu0 0.0
      %832 = vmatpush1.msra.mxu0 0.0
      %833 = vmatprep.subr.mxu0 0.0
      %834 = vmatpush1.msra.mxu0 0.0
      %835 = vmatprep.subr.mxu0 0.0
      %836 = vmatpush1.msra.mxu0 0.0
      %837 = vmatprep.subr.mxu0 0.0
      %838 = vmatpush1.msra.mxu0 0.0
      %839 = vmatprep.subr.mxu0 0.0
      %840 = vmatpush1.msra.mxu0 0.0
      %841 = vmatprep.subr.mxu0 0.0
      %842 = vmatpush1.msra.mxu0 0.0
      %843 = vmatprep.subr.mxu0 0.0
      %844 = vmatpush1.msra.mxu0 0.0
      %845 = vmatprep.subr.mxu0 0.0
      %846 = vmatpush1.msra.mxu0 %v739
      %847 = vmatprep.subr.mxu0 0.0
      %848 = vmatpush1.msra.mxu0 %v738
      %849 = vmatprep.subr.mxu0 0.0
      %850 = vmatpush1.msra.mxu0 %v737
      %851 = vmatprep.subr.mxu0 0.0
      %852 = vmatpush1.msra.mxu0 %v736
      %853 = vmatprep.subr.mxu0 0.0
      %854 = vmatpush2.msra.mxu0 0.0
      %855 = vmatprep.subr.mxu0 0.0
      %856 = vmatpush2.msra.mxu0 0.0
      %857 = vmatprep.subr.mxu0 0.0
      %858 = vmatpush2.msra.mxu0 0.0
      %859 = vmatprep.subr.mxu0 0.0
      %860 = vmatpush2.msra.mxu0 0.0
      %861 = vmatprep.subr.mxu0 0.0
      %862 = vmatpush2.msra.mxu0 0.0
      %863 = vmatprep.subr.mxu0 0.0
      %864 = vmatpush2.msra.mxu0 0.0
      %865 = vmatprep.subr.mxu0 0.0
      %866 = vmatpush2.msra.mxu0 0.0
      %867 = vmatprep.subr.mxu0 0.0
      %868 = vmatpush2.msra.mxu0 0.0
      %869 = vmatprep.subr.mxu0 0.0
      %870 = vmatpush2.msra.mxu0 0.0
      %871 = vmatprep.subr.mxu0 0.0
      %872 = vmatpush2.msra.mxu0 0.0
      %873 = vmatprep.subr.mxu0 0.0
      %874 = vmatpush2.msra.mxu0 0.0
      %875 = vmatprep.subr.mxu0 0.0
      %876 = vmatpush2.msra.mxu0 0.0
      %877 = vmatprep.subr.mxu0 0.0
      %878 = vmatpush2.msra.mxu0 0.0
      %879 = vmatprep.subr.mxu0 0.0
      %880 = vmatpush2.msra.mxu0 0.0
      %881 = vmatprep.subr.mxu0 0.0
      %882 = vmatpush2.msra.mxu0 0.0
      %883 = vmatprep.subr.mxu0 0.0
      %884 = vmatpush2.msra.mxu0 0.0
      %885 = vmatprep.mubr.f32.mxu0 0.0
      %886 = vmatmul.mubr.f32.gmra.mxu0 %v819
      %v887 = vpop.f32.mrf.mxu0
      %v888 = vadd.f32 %v816, %v887
      %v889 = vpop.f32.mrf.mxu0
      %890 = vdwg.mxu0
      %v891 = vmul.f32 %v888, 0.5
      %v892 = vtanh.pop %v891
      %v893 = vadd.f32 %v892, 1.0
      %v894 = vmul.f32 %v893, 0.5
      %vm895 = vcmask 7168
      %v896 = vsel %vm895, %v894, %v888
      %vm897 = vcmask 32768
      %898 = vst.msk [vmem:[%s301] sm:$0x1] %vm897, %v896
      %p899 = scmp.lt.s32.totalorder %s19, 1
      %s900 = scalar_select %p899, %s19, 1
      %s901 = scalar_lea.vmem %s8, %s900
      // Predicated region
      $region53: #{discriminator_forward.1} parent=51 // pred_check
        %p902 = pneg %p210
      $region54: #{discriminator_forward.1} parent=51 // pred_check_branch
        %904 = sbr.rel (%p902) target = $region56
      $region55: #{discriminator_forward.1} parent=51 // pred_region
        _
      $region56: #{discriminator_forward.1} parent=51 // pred_fallthru
        _
    $region52: #{discriminator_forward.1} parent=5 // pred_fallthru
      _
    %p905 = scmp.le.s32.totalorder 2, %s14
    // Predicated region
    $region57: #{discriminator_forward.1} parent=5 // pred_check
      %p906 = pneg %p905
    $region58: #{discriminator_forward.1} parent=5 // pred_check_branch
      %908 = sbr.rel (%p906) target = $region60
    $region59: #{discriminator_forward.1} parent=5 // pred_region
      %s909 = ssub.s32 %s14, 2
      // Predicated region
      $region61: #{discriminator_forward.1} parent=59 // pred_check
        %p910 = pneg %p216
      $region62: #{discriminator_forward.1} parent=59 // pred_check_branch
        %912 = sbr.rel (%p910) target = $region64
      $region63: #{discriminator_forward.1} parent=59 // pred_region
        %p913 = scmp.lt.s32.totalorder %s20, 1
        %s914 = scalar_select %p913, %s20, 1
        %s915 = scalar_lea.vmem %s8, %s914
      $region64: #{discriminator_forward.1} parent=59 // pred_fallthru
        _
    $region60: #{discriminator_forward.1} parent=5 // pred_fallthru
      _
  $region6: #{discriminator_forward.1} parent=0 // loop_footer
    %s18 = sadd.s32 1, %s14
  $region7: #{discriminator_forward.1} parent=0 // loop_footer_branch
    %13 = sbr.rel target = $region3
  $region8: #{discriminator_forward.1} parent=0 // loop_exit
    _

</llo_original>
